<compile_context>
chip_gen: v7x
topology: tpu7x:2x2x1
jax: 0.10.0
libtpu: 0.0.40
codegen_flags: <defaults>
</compile_context>

<pallas_src>
import numpy as np
import jax
import jax.numpy as jnp
from jax.experimental import pallas as pl
from jax.experimental.pallas import tpu as pltpu  # noqa: F401  (kept for TPU-specific params if needed)

# ----------------------------------------------------------------------------
# Graph definition (from the PyTorch script)
# ----------------------------------------------------------------------------
_EDGES = []
for s_grp, d_grp in (((0, 10), (10, 18)), ((10, 18), (18, 24)), ((18, 24), (24, 28))):
    for s in range(*s_grp):
        for d in range(*d_grp):
            _EDGES.append((s, d))
EDGE_INDEX = np.array(_EDGES, dtype=np.int64).T  # shape (2, 160): [src, dst]

NUM_NODES = 28
NUM_NODE_FEATURES = 4   # dataset.num_node_features (x = bias; small feature dim)
HIDDEN = 5
NUM_CLASSES = 3

# padded sizes for TPU tiling
N_PAD = 32          # nodes -> multiple of 8 sublanes
F_PAD = 8           # input features: contraction dim only needs a multiple of 8
H_PAD = 128         # hidden width kept lane-dense
C_PAD = 128         # output width kept lane-dense (avoid masked partial stores)
S_ROWS = 16         # small slab: rows 0..7 = W1 (padded), rows 8/9/10 = b1/b2/b3


# ----------------------------------------------------------------------------
# Pallas kernel: fused  relu((A X) W1 + b1) -> relu(A (H W2) + b2) -> H W3 + b3
# ----------------------------------------------------------------------------
def gcn_kernel(a_ref, x_ref, s_ref, w23_ref, o_ref):
    a = a_ref[...]                      # (32, 32)
    x = x_ref[...]                      # (32, 8)

    # static slices of the packed parameter slabs (zero-cost views)
    w1 = s_ref[0:F_PAD, :]              # (8, 128)
    b1 = s_ref[F_PAD:F_PAD + 1, :]      # (1, 128)
    b2 = s_ref[F_PAD + 1:F_PAD + 2, :]  # (1, 128)
    b3 = s_ref[F_PAD + 2:F_PAD + 3, :]  # (1, 128)
    w2 = w23_ref[:, 0:H_PAD]            # (128, 128)
    w3 = w23_ref[:, H_PAD:2 * H_PAD]    # (128, 128)

    # GCNConv 1 (reassociated):  (A_hat @ X) @ W1 + b1, then ReLU
    ax = jnp.dot(a, x, preferred_element_type=jnp.float32)            # (32, 8)
    h = jnp.dot(ax, w1, preferred_element_type=jnp.float32) + b1      # (32, 128)
    h = jnp.maximum(h, 0.0)

    # GCNConv 2:  A_hat @ (H @ W2) + b2, then ReLU
    h = jnp.dot(h, w2, preferred_element_type=jnp.float32)
    h = jnp.dot(a, h, preferred_element_type=jnp.float32) + b2
    h = jnp.maximum(h, 0.0)

    # Linear:  H @ W3 + b3
    o_ref[...] = jnp.dot(h, w3, preferred_element_type=jnp.float32) + b3


# ----------------------------------------------------------------------------
# One-time packing of padded constants (done at init, NOT per forward call)
# ----------------------------------------------------------------------------
def pack_params(a_hat, x, w1, b1, w2, b2, w3, b3):
    n, f = x.shape
    h = w1.shape[1]
    c = w3.shape[1]

    a_p = jnp.zeros((N_PAD, N_PAD), jnp.float32).at[:n, :n].set(a_hat)
    x_p = jnp.zeros((N_PAD, F_PAD), jnp.float32).at[:n, :f].set(x)

    # small slab: W1 in rows [0:F_PAD), biases in rows F_PAD, F_PAD+1, F_PAD+2
    s_p = jnp.zeros((S_ROWS, H_PAD), jnp.float32)
    s_p = s_p.at[:f, :h].set(w1)
    s_p = s_p.at[F_PAD, :h].set(b1)
    s_p = s_p.at[F_PAD + 1, :h].set(b2)
    s_p = s_p.at[F_PAD + 2, :c].set(b3)

    # W2 | W3 slab
    w23_p = jnp.zeros((H_PAD, 2 * H_PAD), jnp.float32)
    w23_p = w23_p.at[:h, :h].set(w2)
    w23_p = w23_p.at[:h, H_PAD:H_PAD + c].set(w3)

    return a_p, x_p, s_p, w23_p


@jax.jit
def gcn_forward_pallas(a_p, x_p, s_p, w23_p):
    """Inputs are the pre-packed/padded constants from pack_params."""
    out = pl.pallas_call(
        gcn_kernel,
        out_shape=jax.ShapeDtypeStruct((N_PAD, C_PAD), jnp.float32),
        in_specs=[
            pl.BlockSpec((N_PAD, N_PAD), lambda: (0, 0)),
            pl.BlockSpec((N_PAD, F_PAD), lambda: (0, 0)),
            pl.BlockSpec((S_ROWS, H_PAD), lambda: (0, 0)),
            pl.BlockSpec((H_PAD, 2 * H_PAD), lambda: (0, 0)),
        ],
        out_specs=pl.BlockSpec((N_PAD, C_PAD), lambda: (0, 0)),
    )(a_p, x_p, s_p, w23_p)
    return out[:NUM_NODES, :NUM_CLASSES]


# ----------------------------------------------------------------------------
# Glue: GCN symmetric normalization (matches torch_geometric GCNConv defaults:
# add_self_loops=True, improved=False, edge_weight=1)
# ----------------------------------------------------------------------------
def build_normalized_adjacency(edge_index, num_nodes):
    src = jnp.asarray(edge_index[0], jnp.int32)
    dst = jnp.asarray(edge_index[1], jnp.int32)
    loops = jnp.arange(num_nodes, dtype=jnp.int32)
    src_sl = jnp.concatenate([src, loops])
    dst_sl = jnp.concatenate([dst, loops])
    ew = jnp.ones_like(src_sl, jnp.float32)
    deg = jnp.zeros((num_nodes,), jnp.float32).at[dst_sl].add(ew)
    dinv = jnp.where(deg > 0, 1.0 / jnp.sqrt(deg), 0.0)
    norm = dinv[src_sl] * ew * dinv[dst_sl]
    a_hat = jnp.zeros((num_nodes, num_nodes), jnp.float32).at[dst_sl, src_sl].add(norm)
    return a_hat


def gcn_forward_ref(a_hat, x, w1, b1, w2, b2, w3, b3):
    h = jnp.maximum(a_hat @ (x @ w1) + b1, 0.0)
    h = jnp.maximum(a_hat @ (h @ w2) + b2, 0.0)
    return h @ w3 + b3


if __name__ == "__main__":
    key = jax.random.PRNGKey(0)
    kx, k1, kb1, k2, kb2, k3, kb3 = jax.random.split(key, 7)

    # node features (data.x), shape (28, 4)
    x = jax.random.normal(kx, (NUM_NODES, NUM_NODE_FEATURES), jnp.float32)

    # deterministic parameter init (shapes from Net.__init__)
    w1 = jax.random.normal(k1, (NUM_NODE_FEATURES, HIDDEN), jnp.float32) * 0.5
    b1 = jax.random.normal(kb1, (HIDDEN,), jnp.float32) * 0.1
    w2 = jax.random.normal(k2, (HIDDEN, HIDDEN), jnp.float32) * 0.5
    b2 = jax.random.normal(kb2, (HIDDEN,), jnp.float32) * 0.1
    w3 = jax.random.normal(k3, (HIDDEN, NUM_CLASSES), jnp.float32) * 0.5
    b3 = jax.random.normal(kb3, (NUM_CLASSES,), jnp.float32) * 0.1

    a_hat = build_normalized_adjacency(EDGE_INDEX, NUM_NODES)

    # pack/pad constants ONCE (amortized across all subsequent forward calls)
    packed = pack_params(a_hat, x, w1, b1, w2, b2, w3, b3)
    packed = jax.block_until_ready(packed)

    out = gcn_forward_pallas(*packed)
    out = jax.block_until_ready(out)

    ref = gcn_forward_ref(a_hat, x, w1, b1, w2, b2, w3, b3)
    np.testing.assert_allclose(np.asarray(out), np.asarray(ref), rtol=1e-4, atol=1e-5)

    assert out.shape == (NUM_NODES, NUM_CLASSES)
    print("KERNEL_OK")
</pallas_src>

<mosaic_0001>
module attributes {stable_mosaic.version = 11 : i64} {
  func.func @gcn_kernel(%arg0: memref<32x32xf32, #tpu.memory_space<vmem>>, %arg1: memref<32x8xf32, #tpu.memory_space<vmem>>, %arg2: memref<16x128xf32, #tpu.memory_space<vmem>>, %arg3: memref<128x256xf32, #tpu.memory_space<vmem>>, %arg4: memref<32x128xf32, #tpu.memory_space<vmem>>) attributes {dimension_semantics = [], scalar_prefetch = 0 : i64, scratch_operands = 0 : i64, tpu.core_type = #tpu.core_type<tc>} {
    %c0 = arith.constant 0 : index
    %c0_0 = arith.constant 0 : index
    %0 = vector.load %arg0[%c0, %c0_0] : memref<32x32xf32, #tpu.memory_space<vmem>>, vector<32x32xf32>
    %c0_1 = arith.constant 0 : index
    %c0_2 = arith.constant 0 : index
    %1 = vector.load %arg1[%c0_1, %c0_2] : memref<32x8xf32, #tpu.memory_space<vmem>>, vector<32x8xf32>
    %c0_3 = arith.constant 0 : index
    %c0_4 = arith.constant 0 : index
    %2 = vector.load %arg2[%c0_3, %c0_4] : memref<16x128xf32, #tpu.memory_space<vmem>>, vector<8x128xf32>
    %c8 = arith.constant 8 : index
    %c0_5 = arith.constant 0 : index
    %3 = vector.load %arg2[%c8, %c0_5] : memref<16x128xf32, #tpu.memory_space<vmem>>, vector<1x128xf32>
    %c9 = arith.constant 9 : index
    %c0_6 = arith.constant 0 : index
    %4 = vector.load %arg2[%c9, %c0_6] : memref<16x128xf32, #tpu.memory_space<vmem>>, vector<1x128xf32>
    %c10 = arith.constant 10 : index
    %c0_7 = arith.constant 0 : index
    %5 = vector.load %arg2[%c10, %c0_7] : memref<16x128xf32, #tpu.memory_space<vmem>>, vector<1x128xf32>
    %c0_8 = arith.constant 0 : index
    %c0_9 = arith.constant 0 : index
    %6 = vector.load %arg3[%c0_8, %c0_9] : memref<128x256xf32, #tpu.memory_space<vmem>>, vector<128x128xf32>
    %c0_10 = arith.constant 0 : index
    %c128 = arith.constant 128 : index
    %7 = vector.load %arg3[%c0_10, %c128] : memref<128x256xf32, #tpu.memory_space<vmem>>, vector<128x128xf32>
    %cst = arith.constant dense<0.000000e+00> : vector<32x8xf32>
    %8 = tpu.matmul %0, %1, %cst {dimension_numbers = #tpu.dot_dimension_numbers<[1], [0], [0], [1], [0, 0, 1, 1], [], []>} : vector<32x32xf32>, vector<32x8xf32>, vector<32x8xf32> -> vector<32x8xf32>
    %cst_11 = arith.constant dense<0.000000e+00> : vector<32x128xf32>
    %9 = tpu.matmul %8, %2, %cst_11 {dimension_numbers = #tpu.dot_dimension_numbers<[1], [0], [0], [1], [0, 0, 1, 1], [], []>} : vector<32x8xf32>, vector<8x128xf32>, vector<32x128xf32> -> vector<32x128xf32>
    %10 = vector.broadcast %3 : vector<1x128xf32> to vector<32x128xf32>
    %11 = arith.addf %9, %10 : vector<32x128xf32>
    %cst_12 = arith.constant 0.000000e+00 : f32
    %12 = vector.broadcast %cst_12 : f32 to vector<32x128xf32>
    %13 = arith.maximumf %11, %12 : vector<32x128xf32>
    %cst_13 = arith.constant dense<0.000000e+00> : vector<32x128xf32>
    %14 = tpu.matmul %13, %6, %cst_13 {dimension_numbers = #tpu.dot_dimension_numbers<[1], [0], [0], [1], [0, 0, 1, 1], [], []>} : vector<32x128xf32>, vector<128x128xf32>, vector<32x128xf32> -> vector<32x128xf32>
    %cst_14 = arith.constant dense<0.000000e+00> : vector<32x128xf32>
    %15 = tpu.matmul %0, %14, %cst_14 {dimension_numbers = #tpu.dot_dimension_numbers<[1], [0], [0], [1], [0, 0, 1, 1], [], []>} : vector<32x32xf32>, vector<32x128xf32>, vector<32x128xf32> -> vector<32x128xf32>
    %16 = vector.broadcast %4 : vector<1x128xf32> to vector<32x128xf32>
    %17 = arith.addf %15, %16 : vector<32x128xf32>
    %cst_15 = arith.constant 0.000000e+00 : f32
    %18 = vector.broadcast %cst_15 : f32 to vector<32x128xf32>
    %19 = arith.maximumf %17, %18 : vector<32x128xf32>
    %cst_16 = arith.constant dense<0.000000e+00> : vector<32x128xf32>
    %20 = tpu.matmul %19, %7, %cst_16 {dimension_numbers = #tpu.dot_dimension_numbers<[1], [0], [0], [1], [0, 0, 1, 1], [], []>} : vector<32x128xf32>, vector<128x128xf32>, vector<32x128xf32> -> vector<32x128xf32>
    %21 = vector.broadcast %5 : vector<1x128xf32> to vector<32x128xf32>
    %22 = arith.addf %20, %21 : vector<32x128xf32>
    %c0_17 = arith.constant 0 : index
    %c0_18 = arith.constant 0 : index
    %23 = vector.load %arg4[%c0_17, %c0_18] : memref<32x128xf32, #tpu.memory_space<vmem>>, vector<32x128xf32>
    tpu.vector_store %arg4[%c0_17, %c0_18], %22 {strides = array<i32>} : memref<32x128xf32, #tpu.memory_space<vmem>>, vector<32x128xf32>,
    return
  }
}

</mosaic_0001>

<llo_original>
// kernel: gcn_forward_pallas.1
$region0: #{gcn_forward_pallas.1}
  #allocation0 [shape = 'u32[]', space=smem, size = 0x4, offset = 0x4, fixed_abs, tag = 'smem constant byte address 0x4 - core index']
  #allocation1 [shape = 'u32[144,128]{1,0:T(1,128)}', space=vmem, size = 0x12000, scoped, tag = 'internal scratch']
  %s0 = inlined_call_operand.vmem [shape: f32[32,32], index: 0, kind: input, shape index: {}]
  %s1 = inlined_call_operand.vmem [shape: f32[32,8], index: 1, kind: input, shape index: {}]
  %s2 = inlined_call_operand.hbm [shape: f32[16,128], index: 2, kind: input, shape index: {}]
  %s3 = inlined_call_operand.hbm [shape: f32[128,256], index: 3, kind: input, shape index: {}]
  %s4 = inlined_call_operand.vmem [shape: f32[32,128], index: 4, kind: output, shape index: {}]
  %s5 = sld [smem:[#allocation0]]
  $region34: #{gcn_forward_pallas.1} parent=0
    _
  %s7 = ssub.s32 1, %s5
  %s8 = scalar_select 0, %s7, %s5
  $region1: #{gcn_forward_pallas.1} parent=0
    #allocation2 [shape = 'u8[8192]{0}', space=vmem, size = 0x2000, scoped, tag = 'input window, operand 2, single buffered']
    #allocation3 [shape = 's32[1]{0}', space=sflag, size = 0x4, scoped, tag = 'scoped memory for gcn_forward_pallas.1']
    #allocation4 [shape = 'u8[131072]{0}', space=vmem, size = 0x20000, scoped, tag = 'input window, operand 3, single buffered']
    #allocation5 [shape = 's32[1]{0}', space=sflag, size = 0x4, scoped, tag = 'scoped memory for gcn_forward_pallas.1']
    %9 = vsyncpa [#allocation3], 0
    %10 = vsyncpa [#allocation5], 0
    // Predicated region
    $region2: #{gcn_forward_pallas.1} parent=1 // pred_check
      _
    $region3: #{gcn_forward_pallas.1} parent=1 // pred_check_branch
      %12 = sbr.rel (0) target = $region5
    $region4: #{gcn_forward_pallas.1} parent=1 // pred_region
      _
    $region5: #{gcn_forward_pallas.1} parent=1 // pred_fallthru
      _
    // Predicated region
    $region6: #{gcn_forward_pallas.1} parent=1 // pred_check
      _
    $region7: #{gcn_forward_pallas.1} parent=1 // pred_check_branch
      %14 = sbr.rel (0) target = $region9
    $region8: #{gcn_forward_pallas.1} parent=1 // pred_region
      _
    $region9: #{gcn_forward_pallas.1} parent=1 // pred_fallthru
      _
    // Predicated region
    $region10: #{gcn_forward_pallas.1} parent=1 // pred_check
      _
    $region11: #{gcn_forward_pallas.1} parent=1 // pred_check_branch
      %16 = sbr.rel (0) target = $region13
    $region12: #{gcn_forward_pallas.1} parent=1 // pred_region
      %s18 = ssub.s32 256, 256
      %19 = vsyncadd [#allocation3], %s18
      %s20 = sshll.u32 [#allocation2], 4
      %s21 = int_to_ptr.vmem [resolvable:$true] %s20
      %26 = dma.hbm_to_vmem [thread:$0]  %s2, 256, %s21, [#allocation3], 128, 128, 8
    $region13: #{gcn_forward_pallas.1} parent=1 // pred_fallthru
      _
    // Predicated region
    $region14: #{gcn_forward_pallas.1} parent=1 // pred_check
      _
    $region15: #{gcn_forward_pallas.1} parent=1 // pred_check_branch
      %28 = sbr.rel (0) target = $region17
    $region16: #{gcn_forward_pallas.1} parent=1 // pred_region
      %s30 = ssub.s32 4096, 4096
      %31 = vsyncadd [#allocation5], %s30
      %s32 = sshll.u32 [#allocation4], 4
      %s33 = int_to_ptr.vmem [resolvable:$true] %s32
      %38 = dma.hbm_to_vmem [thread:$0]  %s3, 4096, %s33, [#allocation5], 256, 256, 16
    $region17: #{gcn_forward_pallas.1} parent=1 // pred_fallthru
      _
    // Predicated region
    $region18: #{gcn_forward_pallas.1} parent=1 // pred_check
      _
    $region19: #{gcn_forward_pallas.1} parent=1 // pred_check_branch
      %40 = sbr.rel (0) target = $region21
    $region20: #{gcn_forward_pallas.1} parent=1 // pred_region
      %41 = dma.done [#allocation3], 256
    $region21: #{gcn_forward_pallas.1} parent=1 // pred_fallthru
      _
    // Predicated region
    $region22: #{gcn_forward_pallas.1} parent=1 // pred_check
      _
    $region23: #{gcn_forward_pallas.1} parent=1 // pred_check_branch
      %43 = sbr.rel (0) target = $region25
    $region24: #{gcn_forward_pallas.1} parent=1 // pred_region
      %44 = dma.done [#allocation5], 4096
    $region25: #{gcn_forward_pallas.1} parent=1 // pred_fallthru
      _
    %v45 = vld [vmem:[%s0] sm:$0xff]
    %v46 = vld [vmem:[%s0 + $0x8] sm:$0xff]
    %v47 = vld [vmem:[%s0 + $0x10] sm:$0xff]
    %v48 = vld [vmem:[%s0 + $0x18] sm:$0xff]
    %v49 = vld [vmem:[%s1] sm:$0xff]
    %v50 = vld [vmem:[%s1 + $0x8] sm:$0xff]
    %v51 = vld [vmem:[%s1 + $0x10] sm:$0xff]
    %v52 = vld [vmem:[%s1 + $0x18] sm:$0xff]
    %v53 = vld [vmem:[#allocation2] sm:$0xff]
    %v54 = vld [vmem:[#allocation2 + $0x8] sm:$0x1]
    %v55 = vld [vmem:[#allocation2 + $0x9] sm:$0x1]
    %v56 = vld [vmem:[#allocation2 + $0xa] sm:$0x1]
    %v57 = vld [vmem:[#allocation4] sm:$0xff]
    %v58 = vld [vmem:[#allocation4 + $0x10] sm:$0xff]
    %v59 = vld [vmem:[#allocation4 + $0x20] sm:$0xff]
    %v60 = vld [vmem:[#allocation4 + $0x30] sm:$0xff]
    %v61 = vld [vmem:[#allocation4 + $0x40] sm:$0xff]
    %v62 = vld [vmem:[#allocation4 + $0x50] sm:$0xff]
    %v63 = vld [vmem:[#allocation4 + $0x60] sm:$0xff]
    %v64 = vld [vmem:[#allocation4 + $0x70] sm:$0xff]
    %v65 = vld [vmem:[#allocation4 + $0x80] sm:$0xff]
    %v66 = vld [vmem:[#allocation4 + $0x90] sm:$0xff]
    %v67 = vld [vmem:[#allocation4 + $0xa0] sm:$0xff]
    %v68 = vld [vmem:[#allocation4 + $0xb0] sm:$0xff]
    %v69 = vld [vmem:[#allocation4 + $0xc0] sm:$0xff]
    %v70 = vld [vmem:[#allocation4 + $0xd0] sm:$0xff]
    %v71 = vld [vmem:[#allocation4 + $0xe0] sm:$0xff]
    %v72 = vld [vmem:[#allocation4 + $0xf0] sm:$0xff]
    %v73 = vld [vmem:[#allocation4 + $0x8] sm:$0xff]
    %v74 = vld [vmem:[#allocation4 + $0x18] sm:$0xff]
    %v75 = vld [vmem:[#allocation4 + $0x28] sm:$0xff]
    %v76 = vld [vmem:[#allocation4 + $0x38] sm:$0xff]
    %v77 = vld [vmem:[#allocation4 + $0x48] sm:$0xff]
    %v78 = vld [vmem:[#allocation4 + $0x58] sm:$0xff]
    %v79 = vld [vmem:[#allocation4 + $0x68] sm:$0xff]
    %v80 = vld [vmem:[#allocation4 + $0x78] sm:$0xff]
    %v81 = vld [vmem:[#allocation4 + $0x88] sm:$0xff]
    %v82 = vld [vmem:[#allocation4 + $0x98] sm:$0xff]
    %v83 = vld [vmem:[#allocation4 + $0xa8] sm:$0xff]
    %v84 = vld [vmem:[#allocation4 + $0xb8] sm:$0xff]
    %v85 = vld [vmem:[#allocation4 + $0xc8] sm:$0xff]
    %v86 = vld [vmem:[#allocation4 + $0xd8] sm:$0xff]
    %v87 = vld [vmem:[#allocation4 + $0xe8] sm:$0xff]
    %v88 = vld [vmem:[#allocation4 + $0xf8] sm:$0xff]
    %vm89 = vcmask 261120
    %v91 = vsel %vm89, %v45, 0
    %v94 = vsel %vm89, %v46, 0
    %v97 = vsel %vm89, %v47, 0
    %v100 = vsel %vm89, %v48, 0
    %102 = vmatprep.subr.mxu0 0.0
    %103 = vmatpush1.msra.mxu0 %v49
    %104 = vmatprep.subr.mxu0 0.0
    %105 = vmatpush1.msra.mxu0 %v50
    %106 = vmatprep.subr.mxu0 0.0
    %107 = vmatpush1.msra.mxu0 %v51
    %108 = vmatprep.subr.mxu0 0.0
    %109 = vmatpush1.msra.mxu0 %v52
    %110 = vmatprep.subr.mxu0 0.0
    %111 = vmatpush1.msra.mxu0 0.0
    %112 = vmatprep.subr.mxu0 0.0
    %113 = vmatpush1.msra.mxu0 0.0
    %114 = vmatprep.subr.mxu0 0.0
    %115 = vmatpush1.msra.mxu0 0.0
    %116 = vmatprep.subr.mxu0 0.0
    %117 = vmatpush1.msra.mxu0 0.0
    %118 = vmatprep.subr.mxu0 0.0
    %119 = vmatpush1.msra.mxu0 0.0
    %120 = vmatprep.subr.mxu0 0.0
    %121 = vmatpush1.msra.mxu0 0.0
    %122 = vmatprep.subr.mxu0 0.0
    %123 = vmatpush1.msra.mxu0 0.0
    %124 = vmatprep.subr.mxu0 0.0
    %125 = vmatpush1.msra.mxu0 0.0
    %126 = vmatprep.subr.mxu0 0.0
    %127 = vmatpush1.msra.mxu0 0.0
    %128 = vmatprep.subr.mxu0 0.0
    %129 = vmatpush1.msra.mxu0 0.0
    %130 = vmatprep.subr.mxu0 0.0
    %131 = vmatpush1.msra.mxu0 0.0
    %132 = vmatprep.subr.mxu0 0.0
    %133 = vmatpush1.msra.mxu0 0.0
    %134 = vmatprep.subr.mxu0 0.0
    %135 = vmatpush1.msra.mxu0 0.0
    %136 = vmatprep.subr.mxu0 0.0
    %137 = vmatpush1.msra.mxu0 0.0
    %138 = vmatprep.subr.mxu0 0.0
    %139 = vmatpush1.msra.mxu0 0.0
    %140 = vmatprep.subr.mxu0 0.0
    %141 = vmatpush1.msra.mxu0 0.0
    %142 = vmatprep.subr.mxu0 0.0
    %143 = vmatpush1.msra.mxu0 0.0
    %144 = vmatprep.subr.mxu0 0.0
    %145 = vmatpush1.msra.mxu0 0.0
    %146 = vmatprep.subr.mxu0 0.0
    %147 = vmatpush1.msra.mxu0 0.0
    %148 = vmatprep.subr.mxu0 0.0
    %149 = vmatpush1.msra.mxu0 0.0
    %150 = vmatprep.subr.mxu0 0.0
    %151 = vmatpush1.msra.mxu0 0.0
    %152 = vmatprep.subr.mxu0 0.0
    %153 = vmatpush1.msra.mxu0 0.0
    %154 = vmatprep.subr.mxu0 0.0
    %155 = vmatpush1.msra.mxu0 0.0
    %156 = vmatprep.subr.mxu0 0.0
    %157 = vmatpush1.msra.mxu0 0.0
    %158 = vmatprep.subr.mxu0 0.0
    %159 = vmatpush1.msra.mxu0 0.0
    %160 = vmatprep.subr.mxu0 0.0
    %161 = vmatpush1.msra.mxu0 0.0
    %162 = vmatprep.subr.mxu0 0.0
    %163 = vmatpush1.msra.mxu0 0.0
    %164 = vmatprep.subr.mxu0 0.0
    %165 = vmatpush1.msra.mxu0 0.0
    %166 = vmatprep.mubr.f32.mxu0 0.0
    %167 = vmatmul.mubr.f32.gmra.mrb[0].mxu0 %v91
    %v168 = vpop.f32.mrb[0].mxu0
    %v169 = vadd.f32 0.0, %v168
    %v170 = vpop.f32.mrb[0].mxu0
    %171 = vmatprep.mubr.f32.mxu0 0.0
    %172 = vmatmul.mubr.f32.gmra.mrb[0].mxu0 %v94
    %v173 = vpop.f32.mrb[0].mxu0
    %v174 = vadd.f32 0.0, %v173
    %v175 = vpop.f32.mrb[0].mxu0
    %176 = vmatprep.mubr.f32.mxu0 0.0
    %177 = vmatmul.mubr.f32.gmra.mrb[0].mxu0 %v97
    %v178 = vpop.f32.mrb[0].mxu0
    %v179 = vadd.f32 0.0, %v178
    %v180 = vpop.f32.mrb[0].mxu0
    %181 = vmatprep.mubr.f32.mxu0 0.0
    %182 = vmatmul.mubr.f32.gmra.mrb[0].mxu0 %v100
    %v183 = vpop.f32.mrb[0].mxu0
    %v184 = vadd.f32 0.0, %v183
    %v185 = vpop.f32.mrb[0].mxu0
    %186 = vdwg.mxu0
    %v187 = vlaneseq
    %v188 = vshrl.u32 %v187, 7
    %v189 = vsub.s32 0, %v188
    %v190 = vrot.slane %v54, %v189
    %vm191 = vcmask 64512
    %v193 = vsel %vm191, %v169, 0
    %v196 = vsel %vm191, %v174, 0
    %v199 = vsel %vm191, %v179, 0
    %v202 = vsel %vm191, %v184, 0
    %204 = vmatprep.subr.mxu0 0.0
    %205 = vmatpush1.msra.mxu0 %v53
    %206 = vmatprep.subr.mxu0 0.0
    %207 = vmatpush1.msra.mxu0 0.0
    %208 = vmatprep.subr.mxu0 0.0
    %209 = vmatpush1.msra.mxu0 0.0
    %210 = vmatprep.subr.mxu0 0.0
    %211 = vmatpush1.msra.mxu0 0.0
    %212 = vmatprep.subr.mxu0 0.0
    %213 = vmatpush1.msra.mxu0 0.0
    %214 = vmatprep.subr.mxu0 0.0
    %215 = vmatpush1.msra.mxu0 0.0
    %216 = vmatprep.subr.mxu0 0.0
    %217 = vmatpush1.msra.mxu0 0.0
    %218 = vmatprep.subr.mxu0 0.0
    %219 = vmatpush1.msra.mxu0 0.0
    %220 = vmatprep.subr.mxu0 0.0
    %221 = vmatpush1.msra.mxu0 0.0
    %222 = vmatprep.subr.mxu0 0.0
    %223 = vmatpush1.msra.mxu0 0.0
    %224 = vmatprep.subr.mxu0 0.0
    %225 = vmatpush1.msra.mxu0 0.0
    %226 = vmatprep.subr.mxu0 0.0
    %227 = vmatpush1.msra.mxu0 0.0
    %228 = vmatprep.subr.mxu0 0.0
    %229 = vmatpush1.msra.mxu0 0.0
    %230 = vmatprep.subr.mxu0 0.0
    %231 = vmatpush1.msra.mxu0 0.0
    %232 = vmatprep.subr.mxu0 0.0
    %233 = vmatpush1.msra.mxu0 0.0
    %234 = vmatprep.subr.mxu0 0.0
    %235 = vmatpush1.msra.mxu0 0.0
    %236 = vmatprep.subr.mxu0 0.0
    %237 = vmatpush1.msra.mxu0 0.0
    %238 = vmatprep.subr.mxu0 0.0
    %239 = vmatpush1.msra.mxu0 0.0
    %240 = vmatprep.subr.mxu0 0.0
    %241 = vmatpush1.msra.mxu0 0.0
    %242 = vmatprep.subr.mxu0 0.0
    %243 = vmatpush1.msra.mxu0 0.0
    %244 = vmatprep.subr.mxu0 0.0
    %245 = vmatpush1.msra.mxu0 0.0
    %246 = vmatprep.subr.mxu0 0.0
    %247 = vmatpush1.msra.mxu0 0.0
    %248 = vmatprep.subr.mxu0 0.0
    %249 = vmatpush1.msra.mxu0 0.0
    %250 = vmatprep.subr.mxu0 0.0
    %251 = vmatpush1.msra.mxu0 0.0
    %252 = vmatprep.subr.mxu0 0.0
    %253 = vmatpush1.msra.mxu0 0.0
    %254 = vmatprep.subr.mxu0 0.0
    %255 = vmatpush1.msra.mxu0 0.0
    %256 = vmatprep.subr.mxu0 0.0
    %257 = vmatpush1.msra.mxu0 0.0
    %258 = vmatprep.subr.mxu0 0.0
    %259 = vmatpush1.msra.mxu0 0.0
    %260 = vmatprep.subr.mxu0 0.0
    %261 = vmatpush1.msra.mxu0 0.0
    %262 = vmatprep.subr.mxu0 0.0
    %263 = vmatpush1.msra.mxu0 0.0
    %264 = vmatprep.subr.mxu0 0.0
    %265 = vmatpush1.msra.mxu0 0.0
    %266 = vmatprep.subr.mxu0 0.0
    %267 = vmatpush1.msra.mxu0 0.0
    %268 = vmatprep.mubr.f32.mxu0 0.0
    %269 = vmatmul.mubr.f32.gmra.mrb[0].mxu0 %v193
    %v270 = vpop.f32.mrb[0].mxu0
    %v271 = vadd.f32 %v190, %v270
    %v272 = vpop.f32.mrb[0].mxu0
    %273 = vmatprep.mubr.f32.mxu0 0.0
    %274 = vmatmul.mubr.f32.gmra.mrb[0].mxu0 %v196
    %v275 = vpop.f32.mrb[0].mxu0
    %v276 = vadd.f32 %v190, %v275
    %v277 = vpop.f32.mrb[0].mxu0
    %278 = vmatprep.mubr.f32.mxu0 0.0
    %279 = vmatmul.mubr.f32.gmra.mrb[0].mxu0 %v199
    %v280 = vpop.f32.mrb[0].mxu0
    %v281 = vadd.f32 %v190, %v280
    %v282 = vpop.f32.mrb[0].mxu0
    %283 = vmatprep.mubr.f32.mxu0 0.0
    %284 = vmatmul.mubr.f32.gmra.mrb[0].mxu0 %v202
    %v285 = vpop.f32.mrb[0].mxu0
    %v286 = vadd.f32 %v190, %v285
    %v287 = vpop.f32.mrb[0].mxu0
    %288 = vdwg.mxu0
    %v289 = vmax.f32 %v271, 0.0
    %v290 = vmax.f32 %v276, 0.0
    %v291 = vmax.f32 %v281, 0.0
    %v292 = vmax.f32 %v286, 0.0
    %293 = vmatprep.subr.mxu0 0.0
    %294 = vmatpush1.msra.mxu0 %v57
    %295 = vmatprep.subr.mxu0 0.0
    %296 = vmatpush1.msra.mxu0 %v58
    %297 = vmatprep.subr.mxu0 0.0
    %298 = vmatpush1.msra.mxu0 %v59
    %299 = vmatprep.subr.mxu0 0.0
    %300 = vmatpush1.msra.mxu0 %v60
    %301 = vmatprep.subr.mxu0 0.0
    %302 = vmatpush1.msra.mxu0 %v61
    %303 = vmatprep.subr.mxu0 0.0
    %304 = vmatpush1.msra.mxu0 %v62
    %305 = vmatprep.subr.mxu0 0.0
    %306 = vmatpush1.msra.mxu0 %v63
    %307 = vmatprep.subr.mxu0 0.0
    %308 = vmatpush1.msra.mxu0 %v64
    %309 = vmatprep.subr.mxu0 0.0
    %310 = vmatpush1.msra.mxu0 %v65
    %311 = vmatprep.subr.mxu0 0.0
    %312 = vmatpush1.msra.mxu0 %v66
    %313 = vmatprep.subr.mxu0 0.0
    %314 = vmatpush1.msra.mxu0 %v67
    %315 = vmatprep.subr.mxu0 0.0
    %316 = vmatpush1.msra.mxu0 %v68
    %317 = vmatprep.subr.mxu0 0.0
    %318 = vmatpush1.msra.mxu0 %v69
    %319 = vmatprep.subr.mxu0 0.0
    %320 = vmatpush1.msra.mxu0 %v70
    %321 = vmatprep.subr.mxu0 0.0
    %322 = vmatpush1.msra.mxu0 %v71
    %323 = vmatprep.subr.mxu0 0.0
    %324 = vmatpush1.msra.mxu0 %v72
    %325 = vmatprep.subr.mxu0 0.0
    %326 = vmatpush1.msra.mxu0 0.0
    %327 = vmatprep.subr.mxu0 0.0
    %328 = vmatpush1.msra.mxu0 0.0
    %329 = vmatprep.subr.mxu0 0.0
    %330 = vmatpush1.msra.mxu0 0.0
    %331 = vmatprep.subr.mxu0 0.0
    %332 = vmatpush1.msra.mxu0 0.0
    %333 = vmatprep.subr.mxu0 0.0
    %334 = vmatpush1.msra.mxu0 0.0
    %335 = vmatprep.subr.mxu0 0.0
    %336 = vmatpush1.msra.mxu0 0.0
    %337 = vmatprep.subr.mxu0 0.0
    %338 = vmatpush1.msra.mxu0 0.0
    %339 = vmatprep.subr.mxu0 0.0
    %340 = vmatpush1.msra.mxu0 0.0
    %341 = vmatprep.subr.mxu0 0.0
    %342 = vmatpush1.msra.mxu0 0.0
    %343 = vmatprep.subr.mxu0 0.0
    %344 = vmatpush1.msra.mxu0 0.0
    %345 = vmatprep.subr.mxu0 0.0
    %346 = vmatpush1.msra.mxu0 0.0
    %347 = vmatprep.subr.mxu0 0.0
    %348 = vmatpush1.msra.mxu0 0.0
    %349 = vmatprep.subr.mxu0 0.0
    %350 = vmatpush1.msra.mxu0 0.0
    %351 = vmatprep.subr.mxu0 0.0
    %352 = vmatpush1.msra.mxu0 0.0
    %353 = vmatprep.subr.mxu0 0.0
    %354 = vmatpush1.msra.mxu0 0.0
    %355 = vmatprep.subr.mxu0 0.0
    %356 = vmatpush1.msra.mxu0 0.0
    %357 = vmatprep.mubr.f32.mxu0 0.0
    %358 = vmatmul.mubr.f32.gmra.mrb[0].mxu0 %v289
    %v359 = vpop.f32.mrb[0].mxu0
    %v360 = vadd.f32 0.0, %v359
    %v361 = vpop.f32.mrb[0].mxu0
    %362 = vmatprep.mubr.f32.mxu0 0.0
    %363 = vmatmul.mubr.f32.gmra.mrb[0].mxu0 %v290
    %v364 = vpop.f32.mrb[0].mxu0
    %v365 = vadd.f32 0.0, %v364
    %v366 = vpop.f32.mrb[0].mxu0
    %367 = vmatprep.mubr.f32.mxu0 0.0
    %368 = vmatmul.mubr.f32.gmra.mrb[0].mxu0 %v291
    %v369 = vpop.f32.mrb[0].mxu0
    %v370 = vadd.f32 0.0, %v369
    %v371 = vpop.f32.mrb[0].mxu0
    %372 = vmatprep.mubr.f32.mxu0 0.0
    %373 = vmatmul.mubr.f32.gmra.mrb[0].mxu0 %v292
    %v374 = vpop.f32.mrb[0].mxu0
    %v375 = vadd.f32 0.0, %v374
    %v376 = vpop.f32.mrb[0].mxu0
    %377 = vdwg.mxu0
    %v378 = vlaneseq
    %v379 = vshrl.u32 %v378, 7
    %v380 = vsub.s32 0, %v379
    %v381 = vrot.slane %v55, %v380
    %382 = vmatprep.subr.mxu0 0.0
    %383 = vmatpush1.msra.mxu0 %v360
    %384 = vmatprep.subr.mxu0 0.0
    %385 = vmatpush1.msra.mxu0 %v365
    %386 = vmatprep.subr.mxu0 0.0
    %387 = vmatpush1.msra.mxu0 %v370
    %388 = vmatprep.subr.mxu0 0.0
    %389 = vmatpush1.msra.mxu0 %v375
    %390 = vmatprep.subr.mxu0 0.0
    %391 = vmatpush1.msra.mxu0 0.0
    %392 = vmatprep.subr.mxu0 0.0
    %393 = vmatpush1.msra.mxu0 0.0
    %394 = vmatprep.subr.mxu0 0.0
    %395 = vmatpush1.msra.mxu0 0.0
    %396 = vmatprep.subr.mxu0 0.0
    %397 = vmatpush1.msra.mxu0 0.0
    %398 = vmatprep.subr.mxu0 0.0
    %399 = vmatpush1.msra.mxu0 0.0
    %400 = vmatprep.subr.mxu0 0.0
    %401 = vmatpush1.msra.mxu0 0.0
    %402 = vmatprep.subr.mxu0 0.0
    %403 = vmatpush1.msra.mxu0 0.0
    %404 = vmatprep.subr.mxu0 0.0
    %405 = vmatpush1.msra.mxu0 0.0
    %406 = vmatprep.subr.mxu0 0.0
    %407 = vmatpush1.msra.mxu0 0.0
    %408 = vmatprep.subr.mxu0 0.0
    %409 = vmatpush1.msra.mxu0 0.0
    %410 = vmatprep.subr.mxu0 0.0
    %411 = vmatpush1.msra.mxu0 0.0
    %412 = vmatprep.subr.mxu0 0.0
    %413 = vmatpush1.msra.mxu0 0.0
    %414 = vmatprep.subr.mxu0 0.0
    %415 = vmatpush1.msra.mxu0 0.0
    %416 = vmatprep.subr.mxu0 0.0
    %417 = vmatpush1.msra.mxu0 0.0
    %418 = vmatprep.subr.mxu0 0.0
    %419 = vmatpush1.msra.mxu0 0.0
    %420 = vmatprep.subr.mxu0 0.0
    %421 = vmatpush1.msra.mxu0 0.0
    %422 = vmatprep.subr.mxu0 0.0
    %423 = vmatpush1.msra.mxu0 0.0
    %424 = vmatprep.subr.mxu0 0.0
    %425 = vmatpush1.msra.mxu0 0.0
    %426 = vmatprep.subr.mxu0 0.0
    %427 = vmatpush1.msra.mxu0 0.0
    %428 = vmatprep.subr.mxu0 0.0
    %429 = vmatpush1.msra.mxu0 0.0
    %430 = vmatprep.subr.mxu0 0.0
    %431 = vmatpush1.msra.mxu0 0.0
    %432 = vmatprep.subr.mxu0 0.0
    %433 = vmatpush1.msra.mxu0 0.0
    %434 = vmatprep.subr.mxu0 0.0
    %435 = vmatpush1.msra.mxu0 0.0
    %436 = vmatprep.subr.mxu0 0.0
    %437 = vmatpush1.msra.mxu0 0.0
    %438 = vmatprep.subr.mxu0 0.0
    %439 = vmatpush1.msra.mxu0 0.0
    %440 = vmatprep.subr.mxu0 0.0
    %441 = vmatpush1.msra.mxu0 0.0
    %442 = vmatprep.subr.mxu0 0.0
    %443 = vmatpush1.msra.mxu0 0.0
    %444 = vmatprep.subr.mxu0 0.0
    %445 = vmatpush1.msra.mxu0 0.0
    %446 = vmatprep.mubr.f32.mxu0 0.0
    %447 = vmatmul.mubr.f32.gmra.mrb[0].mxu0 %v91
    %v448 = vpop.f32.mrb[0].mxu0
    %v449 = vadd.f32 %v381, %v448
    %v450 = vpop.f32.mrb[0].mxu0
    %451 = vmatprep.mubr.f32.mxu0 0.0
    %452 = vmatmul.mubr.f32.gmra.mrb[0].mxu0 %v94
    %v453 = vpop.f32.mrb[0].mxu0
    %v454 = vadd.f32 %v381, %v453
    %v455 = vpop.f32.mrb[0].mxu0
    %456 = vmatprep.mubr.f32.mxu0 0.0
    %457 = vmatmul.mubr.f32.gmra.mrb[0].mxu0 %v97
    %v458 = vpop.f32.mrb[0].mxu0
    %v459 = vadd.f32 %v381, %v458
    %v460 = vpop.f32.mrb[0].mxu0
    %461 = vmatprep.mubr.f32.mxu0 0.0
    %462 = vmatmul.mubr.f32.gmra.mrb[0].mxu0 %v100
    %v463 = vpop.f32.mrb[0].mxu0
    %v464 = vadd.f32 %v381, %v463
    %v465 = vpop.f32.mrb[0].mxu0
    %466 = vdwg.mxu0
    %v467 = vmax.f32 %v449, 0.0
    %v468 = vmax.f32 %v454, 0.0
    %v469 = vmax.f32 %v459, 0.0
    %v470 = vmax.f32 %v464, 0.0
    %v471 = vlaneseq
    %v472 = vshrl.u32 %v471, 7
    %v473 = vsub.s32 0, %v472
    %v474 = vrot.slane %v56, %v473
    %475 = vmatprep.subr.mxu0 0.0
    %476 = vmatpush1.msra.mxu0 %v73
    %477 = vmatprep.subr.mxu0 0.0
    %478 = vmatpush1.msra.mxu0 %v74
    %479 = vmatprep.subr.mxu0 0.0
    %480 = vmatpush1.msra.mxu0 %v75
    %481 = vmatprep.subr.mxu0 0.0
    %482 = vmatpush1.msra.mxu0 %v76
    %483 = vmatprep.subr.mxu0 0.0
    %484 = vmatpush1.msra.mxu0 %v77
    %485 = vmatprep.subr.mxu0 0.0
    %486 = vmatpush1.msra.mxu0 %v78
    %487 = vmatprep.subr.mxu0 0.0
    %488 = vmatpush1.msra.mxu0 %v79
    %489 = vmatprep.subr.mxu0 0.0
    %490 = vmatpush1.msra.mxu0 %v80
    %491 = vmatprep.subr.mxu0 0.0
    %492 = vmatpush1.msra.mxu0 %v81
    %493 = vmatprep.subr.mxu0 0.0
    %494 = vmatpush1.msra.mxu0 %v82
    %495 = vmatprep.subr.mxu0 0.0
    %496 = vmatpush1.msra.mxu0 %v83
    %497 = vmatprep.subr.mxu0 0.0
    %498 = vmatpush1.msra.mxu0 %v84
    %499 = vmatprep.subr.mxu0 0.0
    %500 = vmatpush1.msra.mxu0 %v85
    %501 = vmatprep.subr.mxu0 0.0
    %502 = vmatpush1.msra.mxu0 %v86
    %503 = vmatprep.subr.mxu0 0.0
    %504 = vmatpush1.msra.mxu0 %v87
    %505 = vmatprep.subr.mxu0 0.0
    %506 = vmatpush1.msra.mxu0 %v88
    %507 = vmatprep.subr.mxu0 0.0
    %508 = vmatpush1.msra.mxu0 0.0
    %509 = vmatprep.subr.mxu0 0.0
    %510 = vmatpush1.msra.mxu0 0.0
    %511 = vmatprep.subr.mxu0 0.0
    %512 = vmatpush1.msra.mxu0 0.0
    %513 = vmatprep.subr.mxu0 0.0
    %514 = vmatpush1.msra.mxu0 0.0
    %515 = vmatprep.subr.mxu0 0.0
    %516 = vmatpush1.msra.mxu0 0.0
    %517 = vmatprep.subr.mxu0 0.0
    %518 = vmatpush1.msra.mxu0 0.0
    %519 = vmatprep.subr.mxu0 0.0
    %520 = vmatpush1.msra.mxu0 0.0
    %521 = vmatprep.subr.mxu0 0.0
    %522 = vmatpush1.msra.mxu0 0.0
    %523 = vmatprep.subr.mxu0 0.0
    %524 = vmatpush1.msra.mxu0 0.0
    %525 = vmatprep.subr.mxu0 0.0
    %526 = vmatpush1.msra.mxu0 0.0
    %527 = vmatprep.subr.mxu0 0.0
    %528 = vmatpush1.msra.mxu0 0.0
    %529 = vmatprep.subr.mxu0 0.0
    %530 = vmatpush1.msra.mxu0 0.0
    %531 = vmatprep.subr.mxu0 0.0
    %532 = vmatpush1.msra.mxu0 0.0
    %533 = vmatprep.subr.mxu0 0.0
    %534 = vmatpush1.msra.mxu0 0.0
    %535 = vmatprep.subr.mxu0 0.0
    %536 = vmatpush1.msra.mxu0 0.0
    %537 = vmatprep.subr.mxu0 0.0
    %538 = vmatpush1.msra.mxu0 0.0
    %539 = vmatprep.mubr.f32.mxu0 0.0
    %540 = vmatmul.mubr.f32.gmra.mrb[0].mxu0 %v467
    %v541 = vpop.f32.mrb[0].mxu0
    %v542 = vadd.f32 %v474, %v541
    %v543 = vpop.f32.mrb[0].mxu0
    %544 = vmatprep.mubr.f32.mxu0 0.0
    %545 = vmatmul.mubr.f32.gmra.mrb[0].mxu0 %v468
    %v546 = vpop.f32.mrb[0].mxu0
    %v547 = vadd.f32 %v474, %v546
    %v548 = vpop.f32.mrb[0].mxu0
    %549 = vmatprep.mubr.f32.mxu0 0.0
    %550 = vmatmul.mubr.f32.gmra.mrb[0].mxu0 %v469
    %v551 = vpop.f32.mrb[0].mxu0
    %v552 = vadd.f32 %v474, %v551
    %v553 = vpop.f32.mrb[0].mxu0
    %554 = vmatprep.mubr.f32.mxu0 0.0
    %555 = vmatmul.mubr.f32.gmra.mrb[0].mxu0 %v470
    %v556 = vpop.f32.mrb[0].mxu0
    %v557 = vadd.f32 %v474, %v556
    %v558 = vpop.f32.mrb[0].mxu0
    %559 = vdwg.mxu0
    %560 = vst [vmem:[%s4] sm:$0xff] %v542
    %561 = vst [vmem:[%s4 + $0x8] sm:$0xff] %v547
    %562 = vst [vmem:[%s4 + $0x10] sm:$0xff] %v552
    %563 = vst [vmem:[%s4 + $0x18] sm:$0xff] %v557
    // Predicated region
    $region26: #{gcn_forward_pallas.1} parent=1 // pred_check
      _
    $region27: #{gcn_forward_pallas.1} parent=1 // pred_check_branch
      %565 = sbr.rel (0) target = $region29
    $region28: #{gcn_forward_pallas.1} parent=1 // pred_region
      _
    $region29: #{gcn_forward_pallas.1} parent=1 // pred_fallthru
      _
    // Predicated region
    $region30: #{gcn_forward_pallas.1} parent=1 // pred_check
      _
    $region31: #{gcn_forward_pallas.1} parent=1 // pred_check_branch
      %567 = sbr.rel (0) target = $region33
    $region32: #{gcn_forward_pallas.1} parent=1 // pred_region
      _
    $region33: #{gcn_forward_pallas.1} parent=1 // pred_fallthru
      _
    %568 = vsyncpa [#allocation3], 1
    %569 = vsyncpa [#allocation5], 1

</llo_original>
